<compile_context>
chip_gen: v7x
topology: tpu7x:2x2x1
jax: 0.10.0
libtpu: 0.0.40
codegen_flags: <defaults>
</compile_context>

<pallas_src>
import functools

import jax
import jax.numpy as jnp
from jax.experimental import pallas as pl
from jax.experimental.pallas import tpu as pltpu


def _round_up(n, m):
    return ((n + m - 1) // m) * m


def _pv_kernel(x_ref, w1_ref, w2_ref, v_ref, policy_ref, value_ref, *, output_size):
    """Fused actor/critic MLP forward on one batch tile.

    x_ref      : (TM, IN)
    w1_ref     : (IN, C)   fused layer-1 weights  [actor | critic | 0]
    w2_ref     : (C, C)    block-diagonal layer-2 weights
    v_ref      : (8, C)    row0=b1_cat row1=b2_cat row2=cw3 row3=cb3 row4=softmax mask (0/-1e30)
    policy_ref : (TM, OUT)
    value_ref  : (TM, 1)
    """
    x = x_ref[...]

    b1 = v_ref[0:1, :]
    b2 = v_ref[1:2, :]
    w3 = v_ref[2:3, :]          # critic_fc3 weights on lanes [OUT:OUT+H], 0 elsewhere
    b3 = v_ref[3:4, 0:1]        # critic_fc3 bias (scalar)
    smask = v_ref[4:5, :]       # additive softmax mask: 0 on logit lanes, -1e30 elsewhere

    # layer 1 (actor + critic fused): h = [tanh(x@aw1+ab1) | tanh(x@cw1+cb1) | 0]
    h = jnp.tanh(jnp.dot(x, w1_ref[...], preferred_element_type=jnp.float32) + b1)

    # layer 2 (block-diagonal fused): z2 = [actor logits | critic pre-tanh h2 | 0]
    z2 = jnp.dot(h, w2_ref[...], preferred_element_type=jnp.float32) + b2

    # ----- actor head: numerically-stable softmax; masked lanes underflow to exactly 0 -----
    logits = z2 + smask
    m = jnp.max(logits, axis=-1, keepdims=True)
    e = jnp.exp(logits - m)
    s = jnp.sum(e, axis=-1, keepdims=True)
    policy = e * pl.reciprocal(s, approx=False)   # exact: keeps 1e-5 parity with reference
    policy_ref[...] = policy[:, :output_size].astype(policy_ref.dtype)

    # ----- critic head: fc3 (N=1) as VPU multiply + lane reduce (w3 zero outside critic lanes) -----
    ch2 = jnp.tanh(z2)
    value = jnp.sum(ch2 * w3, axis=-1, keepdims=True) + b3
    value_ref[...] = value.astype(value_ref.dtype)


def pack_params(params):
    """One-time packing: transpose + concat + pad PyTorch-layout params into lane-dense slabs."""
    H, IN = params["actor_fc1_w"].shape
    OUT = params["actor_fc2_w"].shape[0]
    C = _round_up(max(2 * H, OUT + H, OUT + 1), 128)   # lane width of packed slabs

    w1 = jnp.zeros((IN, C), jnp.float32)
    w1 = w1.at[:, :H].set(params["actor_fc1_w"].T)
    w1 = w1.at[:, H:2 * H].set(params["critic_fc1_w"].T)

    w2 = jnp.zeros((C, C), jnp.float32)                # block-diagonal layer-2 weights
    w2 = w2.at[:H, :OUT].set(params["actor_fc2_w"].T)
    w2 = w2.at[H:2 * H, OUT:OUT + H].set(params["critic_fc2_w"].T)

    vecs = jnp.zeros((8, C), jnp.float32)              # biases + fc3 row + softmax mask
    vecs = vecs.at[0, :H].set(params["actor_fc1_b"])
    vecs = vecs.at[0, H:2 * H].set(params["critic_fc1_b"])
    vecs = vecs.at[1, :OUT].set(params["actor_fc2_b"])
    vecs = vecs.at[1, OUT:OUT + H].set(params["critic_fc2_b"])
    vecs = vecs.at[2, OUT:OUT + H].set(params["critic_fc3_w"][0])
    vecs = vecs.at[3, :].set(params["critic_fc3_b"][0])
    vecs = vecs.at[4, :].set(jnp.where(jnp.arange(C) < OUT, 0.0, -1e30))  # softmax mask row

    return {"w1": w1, "w2": w2, "vecs": vecs, "input_size": IN, "hidden": H,
            "output_size": OUT, "lane_width": C}


def policy_value_forward(x, packed):
    """Per-call hot path: no weight transposes, no input pad, no output re-slicing."""
    B, IN = x.shape
    OUT = packed["output_size"]
    w1, w2, vecs = packed["w1"], packed["w2"], packed["vecs"]

    # Batch tiling: big tiles amortize ~0.35us per-grid-step overhead; for B > 256 keep the
    # tile <= 1024 rows AND at least 2 grid steps so v7x's second TensorCore gets work.
    if B <= 256:
        TM = B                                             # whole (small) batch in one tile
    else:
        TM = min(1024, _round_up(pl.cdiv(B, 2), 8))
    grid = (pl.cdiv(B, TM),)   # ragged last block instead of jnp.pad -> no extra HBM copy of x

    kernel = functools.partial(_pv_kernel, output_size=OUT)

    # NOTE: constant-operand double-buffering (pl.Buffered(1)) skipped: ~84 KB of VMEM hygiene,
    # irrelevant at these sizes.
    policy, value = pl.pallas_call(
        kernel,
        out_shape=(jax.ShapeDtypeStruct((B, OUT), x.dtype),
                   jax.ShapeDtypeStruct((B, 1), x.dtype)),
        grid=grid,
        in_specs=[
            pl.BlockSpec((TM, IN), lambda i: (i, 0)),        # batch-tiled input
            pl.BlockSpec(w1.shape, lambda i: (0, 0)),        # layer-1 weights, VMEM-resident
            pl.BlockSpec(w2.shape, lambda i: (0, 0)),        # layer-2 weights, VMEM-resident
            pl.BlockSpec(vecs.shape, lambda i: (0, 0)),      # bias / mask / fc3 slab
        ],
        out_specs=(
            pl.BlockSpec((TM, OUT), lambda i: (i, 0)),       # policy, exact shape
            pl.BlockSpec((TM, 1), lambda i: (i, 0)),         # value, exact shape
        ),
        compiler_params=pltpu.CompilerParams(dimension_semantics=("parallel",)),
    )(x, w1, w2, vecs)
    return policy, value


def init_params(key, input_size, hidden_size, output_size):
    """Deterministic synthetic parameters with PyTorch nn.Linear shapes: W (out, in), b (out,)."""
    keys = jax.random.split(key, 10)

    def lin(kw, kb, fan_in, fan_out):
        bound = 1.0 / jnp.sqrt(fan_in)
        w = jax.random.uniform(kw, (fan_out, fan_in), jnp.float32, -bound, bound)
        b = jax.random.uniform(kb, (fan_out,), jnp.float32, -bound, bound)
        return w, b

    p = {}
    p["actor_fc1_w"], p["actor_fc1_b"] = lin(keys[0], keys[1], input_size, hidden_size)
    p["actor_fc2_w"], p["actor_fc2_b"] = lin(keys[2], keys[3], hidden_size, output_size)
    p["critic_fc1_w"], p["critic_fc1_b"] = lin(keys[4], keys[5], input_size, hidden_size)
    p["critic_fc2_w"], p["critic_fc2_b"] = lin(keys[6], keys[7], hidden_size, hidden_size)
    p["critic_fc3_w"], p["critic_fc3_b"] = lin(keys[8], keys[9], hidden_size, 1)
    return p


def reference_forward(x, params):
    """Pure-JAX reference of the PyTorch forward, for correctness check."""
    ah = jnp.tanh(x @ params["actor_fc1_w"].T + params["actor_fc1_b"])
    policy = jax.nn.softmax(ah @ params["actor_fc2_w"].T + params["actor_fc2_b"], axis=-1)
    ch = jnp.tanh(x @ params["critic_fc1_w"].T + params["critic_fc1_b"])
    ch = jnp.tanh(ch @ params["critic_fc2_w"].T + params["critic_fc2_b"])
    value = ch @ params["critic_fc3_w"].T + params["critic_fc3_b"]
    return policy, value


if __name__ == "__main__":
    key = jax.random.PRNGKey(0)
    k_x, k_p = jax.random.split(key)

    batch, input_size, hidden_size, output_size = 8, 32, 32, 16
    x = jax.random.normal(k_x, (batch, input_size), jnp.float32)
    params = init_params(k_p, input_size, hidden_size, output_size)
    packed = pack_params(params)          # one-time: transposes/concat/pad out of the hot path

    policy, value = policy_value_forward(x, packed)
    jax.block_until_ready((policy, value))

    ref_policy, ref_value = reference_forward(x, params)
    assert policy.shape == (batch, output_size) and value.shape == (batch, 1)
    assert jnp.allclose(policy, ref_policy, atol=1e-5, rtol=1e-5)
    assert jnp.allclose(value, ref_value, atol=1e-5, rtol=1e-5)

    print("KERNEL_OK")
</pallas_src>

<mosaic_0001>
module attributes {stable_mosaic.version = 11 : i64} {
  func.func @_pv_kernel(%arg0: i32, %arg1: memref<8x32xf32, #tpu.memory_space<vmem>>, %arg2: memref<32x128xf32, #tpu.memory_space<vmem>>, %arg3: memref<128x128xf32, #tpu.memory_space<vmem>>, %arg4: memref<8x128xf32, #tpu.memory_space<vmem>>, %arg5: memref<8x16xf32, #tpu.memory_space<vmem>>, %arg6: memref<8x1xf32, #tpu.memory_space<vmem>>) attributes {dimension_semantics = [#tpu.dimension_semantics<parallel>], iteration_bounds = array<i64: 1>, scalar_prefetch = 0 : i64, scratch_operands = 0 : i64, tpu.core_type = #tpu.core_type<tc>, window_params = [{transform_indices = @transform_0, window_bounds = array<i64: 8, 32>}, {pipeline_mode = #tpu.pipeline_mode<synchronous>, transform_indices = @transform_1, window_bounds = array<i64: 32, 128>}, {pipeline_mode = #tpu.pipeline_mode<synchronous>, transform_indices = @transform_2, window_bounds = array<i64: 128, 128>}, {pipeline_mode = #tpu.pipeline_mode<synchronous>, transform_indices = @transform_3, window_bounds = array<i64: 8, 128>}, {transform_indices = @transform_4, window_bounds = array<i64: 8, 16>}, {transform_indices = @transform_5, window_bounds = array<i64: 8, 1>}]} {
    %c0 = arith.constant 0 : index
    %c0_0 = arith.constant 0 : index
    %0 = vector.load %arg1[%c0, %c0_0] : memref<8x32xf32, #tpu.memory_space<vmem>>, vector<8x32xf32>
    %c0_1 = arith.constant 0 : index
    %c0_2 = arith.constant 0 : index
    %1 = vector.load %arg4[%c0_1, %c0_2] : memref<8x128xf32, #tpu.memory_space<vmem>>, vector<1x128xf32>
    %c1 = arith.constant 1 : index
    %c0_3 = arith.constant 0 : index
    %2 = vector.load %arg4[%c1, %c0_3] : memref<8x128xf32, #tpu.memory_space<vmem>>, vector<1x128xf32>
    %c2 = arith.constant 2 : index
    %c0_4 = arith.constant 0 : index
    %3 = vector.load %arg4[%c2, %c0_4] : memref<8x128xf32, #tpu.memory_space<vmem>>, vector<1x128xf32>
    %c3 = arith.constant 3 : index
    %c0_5 = arith.constant 0 : index
    %4 = vector.load %arg4[%c3, %c0_5] : memref<8x128xf32, #tpu.memory_space<vmem>>, vector<1x1xf32>
    %c4 = arith.constant 4 : index
    %c0_6 = arith.constant 0 : index
    %5 = vector.load %arg4[%c4, %c0_6] : memref<8x128xf32, #tpu.memory_space<vmem>>, vector<1x128xf32>
    %c0_7 = arith.constant 0 : index
    %c0_8 = arith.constant 0 : index
    %6 = vector.load %arg2[%c0_7, %c0_8] : memref<32x128xf32, #tpu.memory_space<vmem>>, vector<32x128xf32>
    %cst = arith.constant dense<0.000000e+00> : vector<8x128xf32>
    %7 = tpu.matmul %0, %6, %cst {dimension_numbers = #tpu.dot_dimension_numbers<[1], [0], [0], [1], [0, 0, 1, 1], [], []>} : vector<8x32xf32>, vector<32x128xf32>, vector<8x128xf32> -> vector<8x128xf32>
    %8 = vector.broadcast %1 : vector<1x128xf32> to vector<8x128xf32>
    %9 = arith.addf %7, %8 : vector<8x128xf32>
    %10 = math.tanh %9 : vector<8x128xf32>
    %c0_9 = arith.constant 0 : index
    %c0_10 = arith.constant 0 : index
    %11 = vector.load %arg3[%c0_9, %c0_10] : memref<128x128xf32, #tpu.memory_space<vmem>>, vector<128x128xf32>
    %cst_11 = arith.constant dense<0.000000e+00> : vector<8x128xf32>
    %12 = tpu.matmul %10, %11, %cst_11 {dimension_numbers = #tpu.dot_dimension_numbers<[1], [0], [0], [1], [0, 0, 1, 1], [], []>} : vector<8x128xf32>, vector<128x128xf32>, vector<8x128xf32> -> vector<8x128xf32>
    %13 = vector.broadcast %2 : vector<1x128xf32> to vector<8x128xf32>
    %14 = arith.addf %12, %13 : vector<8x128xf32>
    %15 = vector.broadcast %5 : vector<1x128xf32> to vector<8x128xf32>
    %16 = arith.addf %14, %15 : vector<8x128xf32>
    %cst_12 = arith.constant dense<0xFF800000> : vector<8xf32>
    %17 = vector.multi_reduction <maximumf>, %16, %cst_12 [1] : vector<8x128xf32> to vector<8xf32>
    %18 = vector.shape_cast %17 : vector<8xf32> to vector<8x1xf32>
    %19 = vector.broadcast %18 : vector<8x1xf32> to vector<8x128xf32>
    %20 = arith.subf %16, %19 : vector<8x128xf32>
    %21 = math.exp %20 : vector<8x128xf32>
    %cst_13 = arith.constant dense<0.000000e+00> : vector<8xf32>
    %22 = vector.multi_reduction <add>, %21, %cst_13 [1] : vector<8x128xf32> to vector<8xf32>
    %23 = vector.shape_cast %22 : vector<8xf32> to vector<8x1xf32>
    %24 = tpu.reciprocal %23 : vector<8x1xf32> -> vector<8x1xf32>
    %25 = vector.broadcast %24 : vector<8x1xf32> to vector<8x128xf32>
    %26 = arith.mulf %21, %25 : vector<8x128xf32>
    %27 = vector.extract_strided_slice %26 {offsets = [0, 0], sizes = [8, 16], strides = [1, 1]} : vector<8x128xf32> to vector<8x16xf32>
    %c0_14 = arith.constant 0 : index
    %c0_15 = arith.constant 0 : index
    %28 = vector.load %arg5[%c0_14, %c0_15] : memref<8x16xf32, #tpu.memory_space<vmem>>, vector<8x16xf32>
    tpu.vector_store %arg5[%c0_14, %c0_15], %27 {strides = array<i32>} : memref<8x16xf32, #tpu.memory_space<vmem>>, vector<8x16xf32>,
    %29 = math.tanh %14 : vector<8x128xf32>
    %30 = vector.broadcast %3 : vector<1x128xf32> to vector<8x128xf32>
    %31 = arith.mulf %29, %30 : vector<8x128xf32>
    %cst_16 = arith.constant dense<0.000000e+00> : vector<8xf32>
    %32 = vector.multi_reduction <add>, %31, %cst_16 [1] : vector<8x128xf32> to vector<8xf32>
    %33 = vector.shape_cast %32 : vector<8xf32> to vector<8x1xf32>
    %34 = vector.broadcast %4 : vector<1x1xf32> to vector<8x1xf32>
    %35 = arith.addf %33, %34 : vector<8x1xf32>
    %c0_17 = arith.constant 0 : index
    %c0_18 = arith.constant 0 : index
    %36 = vector.load %arg6[%c0_17, %c0_18] : memref<8x1xf32, #tpu.memory_space<vmem>>, vector<8x1xf32>
    tpu.vector_store %arg6[%c0_17, %c0_18], %35 {strides = array<i32>} : memref<8x1xf32, #tpu.memory_space<vmem>>, vector<8x1xf32>,
    return
  }
  func.func @transform_0(%arg0: i32) -> (i32, i32) {
    %c0_i32 = arith.constant 0 : i32
    %c0_i32_0 = arith.constant 0 : i32
    return %arg0, %c0_i32 : i32, i32
  }
  func.func @transform_1(%arg0: i32) -> (i32, i32) {
    %c0_i32 = arith.constant 0 : i32
    %c0_i32_0 = arith.constant 0 : i32
    %c0_i32_1 = arith.constant 0 : i32
    return %c0_i32, %c0_i32_0 : i32, i32
  }
  func.func @transform_2(%arg0: i32) -> (i32, i32) {
    %c0_i32 = arith.constant 0 : i32
    %c0_i32_0 = arith.constant 0 : i32
    %c0_i32_1 = arith.constant 0 : i32
    return %c0_i32, %c0_i32_0 : i32, i32
  }
  func.func @transform_3(%arg0: i32) -> (i32, i32) {
    %c0_i32 = arith.constant 0 : i32
    %c0_i32_0 = arith.constant 0 : i32
    %c0_i32_1 = arith.constant 0 : i32
    return %c0_i32, %c0_i32_0 : i32, i32
  }
  func.func @transform_4(%arg0: i32) -> (i32, i32) {
    %c0_i32 = arith.constant 0 : i32
    %c0_i32_0 = arith.constant 0 : i32
    return %arg0, %c0_i32 : i32, i32
  }
  func.func @transform_5(%arg0: i32) -> (i32, i32) {
    %c0_i32 = arith.constant 0 : i32
    %c0_i32_0 = arith.constant 0 : i32
    return %arg0, %c0_i32 : i32, i32
  }
}

</mosaic_0001>

<llo_original>
// kernel: tpu_custom_call.1
$region0: #{tpu_custom_call.1}
  #allocation0 [shape = 'u32[]', space=smem, size = 0x4, offset = 0x4, fixed_abs, tag = 'smem constant byte address 0x4 - core index']
  #allocation1 [shape = 'u32[144,128]{1,0:T(1,128)}', space=vmem, size = 0x12000, scoped, tag = 'internal scratch']
  %s0 = inlined_call_operand.hbm [shape: f32[8,32], index: 0, kind: input, shape index: {}]
  %s1 = inlined_call_operand.hbm [shape: f32[32,128], index: 1, kind: input, shape index: {}]
  %s2 = inlined_call_operand.hbm [shape: f32[128,128], index: 2, kind: input, shape index: {}]
  %s3 = inlined_call_operand.vmem [shape: f32[8,128], index: 3, kind: input, shape index: {}]
  %s4 = inlined_call_operand.hbm [shape: f32[8,16], index: 4, kind: output, shape index: {0}]
  %s5 = inlined_call_operand.vmem [shape: f32[8,1], index: 5, kind: output, shape index: {1}]
  %6 = xla_tuple %s4, %s5
  %s7 = sld [smem:[#allocation0]]
  $region46: #{tpu_custom_call.1} parent=0
    _
  %s9 = ssub.s32 1, %s7
  %s10 = scalar_select 0, %s9, %s7
  $region1: #{tpu_custom_call.1} parent=0
    #allocation2 [shape = 'u8[4096]{0}', space=vmem, size = 0x1000, scoped, tag = 'input window, operand 0, single buffered']
    #allocation3 [shape = 's32[1]{0}', space=sflag, size = 0x4, scoped, tag = 'scoped memory for tpu_custom_call.1']
    #allocation4 [shape = 's32[1]{0}', space=sflag, size = 0x4, scoped, tag = 'scoped memory for tpu_custom_call.1']
    #allocation5 [shape = 'u8[16384]{0}', space=vmem, size = 0x4000, scoped, tag = 'input window, operand 1, single buffered']
    #allocation6 [shape = 's32[1]{0}', space=sflag, size = 0x4, scoped, tag = 'scoped memory for tpu_custom_call.1']
    #allocation7 [shape = 'u8[65536]{0}', space=vmem, size = 0x10000, scoped, tag = 'input window, operand 2, single buffered']
    #allocation8 [shape = 'u8[4096]{0}', space=vmem, size = 0x1000, scoped, tag = 'output window, operand 0, single buffered']
    %11 = vsyncpa [#allocation3], 0
    %12 = vsyncpa [#allocation6], 0
    %13 = vsyncpa [#allocation4], 0
    // Predicated region
    $region2: #{tpu_custom_call.1} parent=1 // pred_check
      _
    $region3: #{tpu_custom_call.1} parent=1 // pred_check_branch
      %15 = sbr.rel (0) target = $region5
    $region4: #{tpu_custom_call.1} parent=1 // pred_region
      %s17 = ssub.s32 128, 128
      %18 = vsyncadd [#allocation3], %s17
      %s20 = sshll.u32 [#allocation2], 4
      %s21 = int_to_ptr.vmem [resolvable:$true] %s20
      %23 = dma.hbm_to_vmem [thread:$0]  %s0, 128, %s21, [#allocation3]
    $region5: #{tpu_custom_call.1} parent=1 // pred_fallthru
      _
    // Predicated region
    $region6: #{tpu_custom_call.1} parent=1 // pred_check
      _
    $region7: #{tpu_custom_call.1} parent=1 // pred_check_branch
      %25 = sbr.rel (0) target = $region9
    $region8: #{tpu_custom_call.1} parent=1 // pred_region
      %s27 = ssub.s32 512, 512
      %28 = vsyncadd [#allocation6], %s27
      %s29 = sshll.u32 [#allocation5], 4
      %s30 = int_to_ptr.vmem [resolvable:$true] %s29
      %35 = dma.hbm_to_vmem [thread:$0]  %s1, 512, %s30, [#allocation6], 128, 128, 8
    $region9: #{tpu_custom_call.1} parent=1 // pred_fallthru
      _
    // Predicated region
    $region10: #{tpu_custom_call.1} parent=1 // pred_check
      _
    $region11: #{tpu_custom_call.1} parent=1 // pred_check_branch
      %37 = sbr.rel (0) target = $region13
    $region12: #{tpu_custom_call.1} parent=1 // pred_region
      %s39 = ssub.s32 2048, 2048
      %40 = vsyncadd [#allocation6], %s39
      %s41 = sshll.u32 [#allocation7], 4
      %s42 = int_to_ptr.vmem [resolvable:$true] %s41
      %47 = dma.hbm_to_vmem [thread:$0]  %s2, 2048, %s42, [#allocation6], 128, 128, 8
    $region13: #{tpu_custom_call.1} parent=1 // pred_fallthru
      _
    // Predicated region
    $region14: #{tpu_custom_call.1} parent=1 // pred_check
      _
    $region15: #{tpu_custom_call.1} parent=1 // pred_check_branch
      %49 = sbr.rel (0) target = $region17
    $region16: #{tpu_custom_call.1} parent=1 // pred_region
      _
    $region17: #{tpu_custom_call.1} parent=1 // pred_fallthru
      _
    // Predicated region
    $region18: #{tpu_custom_call.1} parent=1 // pred_check
      _
    $region19: #{tpu_custom_call.1} parent=1 // pred_check_branch
      %51 = sbr.rel (0) target = $region21
    $region20: #{tpu_custom_call.1} parent=1 // pred_region
      %52 = dma.done [#allocation3], 128
    $region21: #{tpu_custom_call.1} parent=1 // pred_fallthru
      _
    // Predicated region
    $region22: #{tpu_custom_call.1} parent=1 // pred_check
      _
    $region23: #{tpu_custom_call.1} parent=1 // pred_check_branch
      %54 = sbr.rel (0) target = $region25
    $region24: #{tpu_custom_call.1} parent=1 // pred_region
      %55 = dma.done [#allocation6], 512
    $region25: #{tpu_custom_call.1} parent=1 // pred_fallthru
      _
    // Predicated region
    $region26: #{tpu_custom_call.1} parent=1 // pred_check
      _
    $region27: #{tpu_custom_call.1} parent=1 // pred_check_branch
      %57 = sbr.rel (0) target = $region29
    $region28: #{tpu_custom_call.1} parent=1 // pred_region
      %58 = dma.done [#allocation6], 2048
    $region29: #{tpu_custom_call.1} parent=1 // pred_fallthru
      _
    %v59 = vld [vmem:[#allocation2] sm:$0xff]
    %v60 = vld [vmem:[%s3] sm:$0x1]
    %v61 = vld [vmem:[%s3 + $0x1] sm:$0x1]
    %v62 = vld [vmem:[%s3 + $0x2] sm:$0x1]
    %v63 = vld [vmem:[%s3 + $0x3] sm:$0x1]
    %v64 = vld [vmem:[%s3 + $0x4] sm:$0x1]
    %v65 = vld [vmem:[#allocation5] sm:$0xff]
    %v66 = vld [vmem:[#allocation5 + $0x8] sm:$0xff]
    %v67 = vld [vmem:[#allocation5 + $0x10] sm:$0xff]
    %v68 = vld [vmem:[#allocation5 + $0x18] sm:$0xff]
    %v69 = vlaneseq
    %v70 = vshrl.u32 %v69, 7
    %v71 = vsub.s32 0, %v70
    %v72 = vrot.slane %v60, %v71
    %vm73 = vcmask 261120
    %v75 = vsel %vm73, %v59, 0
    %77 = vmatprep.subr.mxu0 0.0
    %78 = vmatpush1.msra.mxu0 %v65
    %79 = vmatprep.subr.mxu0 0.0
    %80 = vmatpush1.msra.mxu0 %v66
    %81 = vmatprep.subr.mxu0 0.0
    %82 = vmatpush1.msra.mxu0 %v67
    %83 = vmatprep.subr.mxu0 0.0
    %84 = vmatpush1.msra.mxu0 %v68
    %85 = vmatprep.subr.mxu0 0.0
    %86 = vmatpush1.msra.mxu0 0.0
    %87 = vmatprep.subr.mxu0 0.0
    %88 = vmatpush1.msra.mxu0 0.0
    %89 = vmatprep.subr.mxu0 0.0
    %90 = vmatpush1.msra.mxu0 0.0
    %91 = vmatprep.subr.mxu0 0.0
    %92 = vmatpush1.msra.mxu0 0.0
    %93 = vmatprep.subr.mxu0 0.0
    %94 = vmatpush1.msra.mxu0 0.0
    %95 = vmatprep.subr.mxu0 0.0
    %96 = vmatpush1.msra.mxu0 0.0
    %97 = vmatprep.subr.mxu0 0.0
    %98 = vmatpush1.msra.mxu0 0.0
    %99 = vmatprep.subr.mxu0 0.0
    %100 = vmatpush1.msra.mxu0 0.0
    %101 = vmatprep.subr.mxu0 0.0
    %102 = vmatpush1.msra.mxu0 0.0
    %103 = vmatprep.subr.mxu0 0.0
    %104 = vmatpush1.msra.mxu0 0.0
    %105 = vmatprep.subr.mxu0 0.0
    %106 = vmatpush1.msra.mxu0 0.0
    %107 = vmatprep.subr.mxu0 0.0
    %108 = vmatpush1.msra.mxu0 0.0
    %109 = vmatprep.subr.mxu0 0.0
    %110 = vmatpush1.msra.mxu0 0.0
    %111 = vmatprep.subr.mxu0 0.0
    %112 = vmatpush1.msra.mxu0 0.0
    %113 = vmatprep.subr.mxu0 0.0
    %114 = vmatpush1.msra.mxu0 0.0
    %115 = vmatprep.subr.mxu0 0.0
    %116 = vmatpush1.msra.mxu0 0.0
    %117 = vmatprep.subr.mxu0 0.0
    %118 = vmatpush1.msra.mxu0 0.0
    %119 = vmatprep.subr.mxu0 0.0
    %120 = vmatpush1.msra.mxu0 0.0
    %121 = vmatprep.subr.mxu0 0.0
    %122 = vmatpush1.msra.mxu0 0.0
    %123 = vmatprep.subr.mxu0 0.0
    %124 = vmatpush1.msra.mxu0 0.0
    %125 = vmatprep.subr.mxu0 0.0
    %126 = vmatpush1.msra.mxu0 0.0
    %127 = vmatprep.subr.mxu0 0.0
    %128 = vmatpush1.msra.mxu0 0.0
    %129 = vmatprep.subr.mxu0 0.0
    %130 = vmatpush1.msra.mxu0 0.0
    %131 = vmatprep.subr.mxu0 0.0
    %132 = vmatpush1.msra.mxu0 0.0
    %133 = vmatprep.subr.mxu0 0.0
    %134 = vmatpush1.msra.mxu0 0.0
    %135 = vmatprep.subr.mxu0 0.0
    %136 = vmatpush1.msra.mxu0 0.0
    %137 = vmatprep.subr.mxu0 0.0
    %138 = vmatpush1.msra.mxu0 0.0
    %139 = vmatprep.subr.mxu0 0.0
    %140 = vmatpush1.msra.mxu0 0.0
    %141 = vmatprep.mubr.f32.mxu0 0.0
    %142 = vmatmul.mubr.f32.gmra.mrb[0].mxu0 %v75
    %v143 = vpop.f32.mrb[0].mxu0
    %v144 = vadd.f32 %v72, %v143
    %v145 = vpop.f32.mrb[0].mxu0
    %146 = vdwg.mxu0
    %v147 = vtanh.pop %v144
    %v148 = vld [vmem:[#allocation7] sm:$0xff]
    %v149 = vld [vmem:[#allocation7 + $0x8] sm:$0xff]
    %v150 = vld [vmem:[#allocation7 + $0x10] sm:$0xff]
    %v151 = vld [vmem:[#allocation7 + $0x18] sm:$0xff]
    %v152 = vld [vmem:[#allocation7 + $0x20] sm:$0xff]
    %v153 = vld [vmem:[#allocation7 + $0x28] sm:$0xff]
    %v154 = vld [vmem:[#allocation7 + $0x30] sm:$0xff]
    %v155 = vld [vmem:[#allocation7 + $0x38] sm:$0xff]
    %v156 = vld [vmem:[#allocation7 + $0x40] sm:$0xff]
    %v157 = vld [vmem:[#allocation7 + $0x48] sm:$0xff]
    %v158 = vld [vmem:[#allocation7 + $0x50] sm:$0xff]
    %v159 = vld [vmem:[#allocation7 + $0x58] sm:$0xff]
    %v160 = vld [vmem:[#allocation7 + $0x60] sm:$0xff]
    %v161 = vld [vmem:[#allocation7 + $0x68] sm:$0xff]
    %v162 = vld [vmem:[#allocation7 + $0x70] sm:$0xff]
    %v163 = vld [vmem:[#allocation7 + $0x78] sm:$0xff]
    %v164 = vlaneseq
    %v165 = vshrl.u32 %v164, 7
    %v166 = vsub.s32 0, %v165
    %v167 = vrot.slane %v61, %v166
    %168 = vmatprep.subr.mxu0 0.0
    %169 = vmatpush1.msra.mxu0 %v148
    %170 = vmatprep.subr.mxu0 0.0
    %171 = vmatpush1.msra.mxu0 %v149
    %172 = vmatprep.subr.mxu0 0.0
    %173 = vmatpush1.msra.mxu0 %v150
    %174 = vmatprep.subr.mxu0 0.0
    %175 = vmatpush1.msra.mxu0 %v151
    %176 = vmatprep.subr.mxu0 0.0
    %177 = vmatpush1.msra.mxu0 %v152
    %178 = vmatprep.subr.mxu0 0.0
    %179 = vmatpush1.msra.mxu0 %v153
    %180 = vmatprep.subr.mxu0 0.0
    %181 = vmatpush1.msra.mxu0 %v154
    %182 = vmatprep.subr.mxu0 0.0
    %183 = vmatpush1.msra.mxu0 %v155
    %184 = vmatprep.subr.mxu0 0.0
    %185 = vmatpush1.msra.mxu0 %v156
    %186 = vmatprep.subr.mxu0 0.0
    %187 = vmatpush1.msra.mxu0 %v157
    %188 = vmatprep.subr.mxu0 0.0
    %189 = vmatpush1.msra.mxu0 %v158
    %190 = vmatprep.subr.mxu0 0.0
    %191 = vmatpush1.msra.mxu0 %v159
    %192 = vmatprep.subr.mxu0 0.0
    %193 = vmatpush1.msra.mxu0 %v160
    %194 = vmatprep.subr.mxu0 0.0
    %195 = vmatpush1.msra.mxu0 %v161
    %196 = vmatprep.subr.mxu0 0.0
    %197 = vmatpush1.msra.mxu0 %v162
    %198 = vmatprep.subr.mxu0 0.0
    %199 = vmatpush1.msra.mxu0 %v163
    %200 = vmatprep.subr.mxu0 0.0
    %201 = vmatpush1.msra.mxu0 0.0
    %202 = vmatprep.subr.mxu0 0.0
    %203 = vmatpush1.msra.mxu0 0.0
    %204 = vmatprep.subr.mxu0 0.0
    %205 = vmatpush1.msra.mxu0 0.0
    %206 = vmatprep.subr.mxu0 0.0
    %207 = vmatpush1.msra.mxu0 0.0
    %208 = vmatprep.subr.mxu0 0.0
    %209 = vmatpush1.msra.mxu0 0.0
    %210 = vmatprep.subr.mxu0 0.0
    %211 = vmatpush1.msra.mxu0 0.0
    %212 = vmatprep.subr.mxu0 0.0
    %213 = vmatpush1.msra.mxu0 0.0
    %214 = vmatprep.subr.mxu0 0.0
    %215 = vmatpush1.msra.mxu0 0.0
    %216 = vmatprep.subr.mxu0 0.0
    %217 = vmatpush1.msra.mxu0 0.0
    %218 = vmatprep.subr.mxu0 0.0
    %219 = vmatpush1.msra.mxu0 0.0
    %220 = vmatprep.subr.mxu0 0.0
    %221 = vmatpush1.msra.mxu0 0.0
    %222 = vmatprep.subr.mxu0 0.0
    %223 = vmatpush1.msra.mxu0 0.0
    %224 = vmatprep.subr.mxu0 0.0
    %225 = vmatpush1.msra.mxu0 0.0
    %226 = vmatprep.subr.mxu0 0.0
    %227 = vmatpush1.msra.mxu0 0.0
    %228 = vmatprep.subr.mxu0 0.0
    %229 = vmatpush1.msra.mxu0 0.0
    %230 = vmatprep.subr.mxu0 0.0
    %231 = vmatpush1.msra.mxu0 0.0
    %232 = vmatprep.mubr.f32.mxu0 0.0
    %233 = vmatmul.mubr.f32.gmra.mrb[0].mxu0 %v147
    %v234 = vpop.f32.mrb[0].mxu0
    %v235 = vadd.f32 %v167, %v234
    %v236 = vpop.f32.mrb[0].mxu0
    %237 = vdwg.mxu0
    %v238 = vlaneseq
    %v239 = vshrl.u32 %v238, 7
    %v240 = vsub.s32 0, %v239
    %v241 = vrot.slane %v64, %v240
    %v242 = vadd.f32 %v235, %v241
    %243 = vmax.xlane.f32.xlu0 %v242
    %v244 = vpop.xlane.xlu0 %243
    %v245 = vsub.f32 %v242, %v244
    %v246 = vmul.f32 %v245, 1.442695
    %v247 = vpow.pop %v246
    %248 = vadd.xlane.f32.xlu0 %v247
    %v249 = vpop.xlane.xlu0 %248
    %v250 = vrcp.pop %v249
    %v251 = vmul.f32 %v247, %v250
    %vm252 = vcmask 130048
    %253 = vst.msk [vmem:[#allocation8] sm:$0xff] %vm252, %v251
    %v254 = vtanh.pop %v235
    %v255 = vlaneseq
    %v256 = vshrl.u32 %v255, 7
    %v257 = vsub.s32 0, %v256
    %v258 = vrot.slane %v62, %v257
    %v259 = vmul.f32 %v254, %v258
    %260 = vadd.xlane.f32.xlu0 %v259
    %v261 = vpop.xlane.xlu0 %260
    %v262 = vlaneseq
    %v263 = vshrl.u32 %v262, 7
    %v264 = vsub.s32 0, %v263
    %v265 = vrot.slane %v63, %v264
    %v266 = vadd.f32 %v261, %v265
    %vm267 = vcmask 7168
    %268 = vst.msk [vmem:[%s5] sm:$0xff] %vm267, %v266
    // Predicated region
    $region30: #{tpu_custom_call.1} parent=1 // pred_check
      _
    $region31: #{tpu_custom_call.1} parent=1 // pred_check_branch
      %270 = sbr.rel (0) target = $region33
    $region32: #{tpu_custom_call.1} parent=1 // pred_region
      %s272 = ssub.s32 128, 128
      %273 = vsyncadd [#allocation4], %s272
      %s275 = sshll.u32 [#allocation8], 4
      %s276 = int_to_ptr.vmem [resolvable:$true] %s275
      %278 = dma.vmem_to_hbm [thread:$0]  %s276, 128, %s4, [#allocation4]
    $region33: #{tpu_custom_call.1} parent=1 // pred_fallthru
      _
    // Predicated region
    $region34: #{tpu_custom_call.1} parent=1 // pred_check
      _
    $region35: #{tpu_custom_call.1} parent=1 // pred_check_branch
      %280 = sbr.rel (0) target = $region37
    $region36: #{tpu_custom_call.1} parent=1 // pred_region
      _
    $region37: #{tpu_custom_call.1} parent=1 // pred_fallthru
      _
    // Predicated region
    $region38: #{tpu_custom_call.1} parent=1 // pred_check
      _
    $region39: #{tpu_custom_call.1} parent=1 // pred_check_branch
      %282 = sbr.rel (0) target = $region41
    $region40: #{tpu_custom_call.1} parent=1 // pred_region
      %283 = dma.done [#allocation4], 128
    $region41: #{tpu_custom_call.1} parent=1 // pred_fallthru
      _
    // Predicated region
    $region42: #{tpu_custom_call.1} parent=1 // pred_check
      _
    $region43: #{tpu_custom_call.1} parent=1 // pred_check_branch
      %285 = sbr.rel (0) target = $region45
    $region44: #{tpu_custom_call.1} parent=1 // pred_region
      _
    $region45: #{tpu_custom_call.1} parent=1 // pred_fallthru
      _
    %286 = vsyncpa [#allocation3], 1
    %287 = vsyncpa [#allocation6], 1
    %288 = vsyncpa [#allocation4], 1

</llo_original>
